<compile_context>
chip_gen: v6e
topology: v6e:2x2x1
jax: 0.10.0
libtpu: 0.0.40
codegen_flags: <defaults>
</compile_context>

<pallas_src>
import math

import jax
import jax.numpy as jnp
from jax import lax
from jax.experimental import pallas as pl
from jax.experimental.pallas import tpu as pltpu

LANE = 128
SUBLANE = 8
MAX_BATCH_TILE = 256   # MXU LHS height on v6e / v7x


def _ru(n, m):
    return ((n + m - 1) // m) * m


def _pad_to(a, shape):
    return jnp.pad(a, [(0, s - d) for d, s in zip(a.shape, shape)])


def _const_spec(arr):
    # Weight spec: full-array block, constant index -> stays VMEM-resident
    # across all grid iterations (no re-DMA).
    nd = arr.ndim
    return pl.BlockSpec(arr.shape, lambda j, _n=nd: (0,) * _n)


# ----------------------------- Pallas kernels ------------------------------

def _make_mlp_kernel(n_layers, n_steps, bt, h_pad):
    n_param = 2 * n_layers + 2  # (w,b) per layer + (w_out, b_out)

    def kernel(x_ref, *rest):
        params = rest[:n_param]
        out_ref = rest[n_param]
        h = x_ref[...]                                    # (T*BT, F_pad) bf16
        for l in range(n_layers):
            w_ref = params[2 * l]
            b = params[2 * l + 1][...]                    # f32
            h = jnp.maximum(
                jnp.dot(h.astype(jnp.bfloat16), w_ref[...],
                        preferred_element_type=jnp.float32) + b, 0.0)
        # fused final linear over the flattened (T*H) feature axis:
        # out[b] = b_out + sum_t h[t,b] @ W_out[t]  (128-lane aligned chunks)
        w_out_ref = params[-2]
        b_out = params[-1][...]
        acc = jnp.broadcast_to(b_out, out_ref.shape)      # init with bias
        for t in range(n_steps):
            h_t = h[t * bt:(t + 1) * bt, :].astype(jnp.bfloat16)
            w_t = w_out_ref[t * h_pad:(t + 1) * h_pad, :]
            acc = acc + jnp.dot(h_t, w_t, preferred_element_type=jnp.float32)
        out_ref[...] = acc
    return kernel


def _make_recurrent_kernel(cell_type, n_layers, n_steps, bt, h_pad):
    n_param = 3 * n_layers + 2  # (w_ih, w_hh, b) per layer + (w_out, b_out)
    is_lstm = cell_type == "lstm"

    def kernel(x_ref, *rest):
        params = rest[:n_param]
        out_ref = rest[n_param]
        xp_ref = rest[n_param + 1]     # (T*BT, G*H_pad) hoisted projection, f32
        seq_ref = rest[n_param + 2]    # (T*BT, H_pad) inter-layer sequence, f32

        h = jnp.zeros((bt, h_pad), jnp.float32)
        for l in range(n_layers):
            w_ih_ref = params[3 * l]
            w_hh_ref = params[3 * l + 1]      # keep as ref; reload per step
            b = params[3 * l + 2][...]        # f32

            seq = x_ref[...] if l == 0 else seq_ref[...].astype(jnp.bfloat16)
            # Hoisted input projection: one big bf16 MXU matmul + bias per
            # layer; only h @ W_hh remains on the per-step serial chain.
            xp_ref[...] = (jnp.dot(seq, w_ih_ref[...],
                                   preferred_element_type=jnp.float32) + b)

            h = jnp.zeros((bt, h_pad), jnp.float32)
            if is_lstm:
                c = jnp.zeros((bt, h_pad), jnp.float32)
            for t in range(n_steps):          # fully unrolled, static slices
                g = (xp_ref[t * bt:(t + 1) * bt, :]
                     + jnp.dot(h.astype(jnp.bfloat16), w_hh_ref[...],
                               preferred_element_type=jnp.float32))
                if is_lstm:
                    # gates packed (i, f, o, g): one contiguous sigmoid slab
                    sig = jax.nn.sigmoid(g[:, :3 * h_pad])
                    i = sig[:, 0 * h_pad:1 * h_pad]
                    f = sig[:, 1 * h_pad:2 * h_pad]
                    o = sig[:, 2 * h_pad:3 * h_pad]
                    gg = jnp.tanh(g[:, 3 * h_pad:4 * h_pad])
                    c = f * c + i * gg
                    h = o * jnp.tanh(c)
                else:
                    h = jnp.tanh(g)
                if l < n_layers - 1:          # last layer: only final h is used
                    seq_ref[t * bt:(t + 1) * bt, :] = h

        w_out = params[-2][...]
        b_out = params[-1][...]
        out_ref[...] = (jnp.dot(h.astype(jnp.bfloat16), w_out,
                                preferred_element_type=jnp.float32) + b_out)
    return kernel


# ----------------------------- Pallas wrappers -----------------------------

def presnet_forward_pallas(cell_type, params, x, n_hidden):
    # TODO(synk): torch.nn.Dropout is treated as eval-mode identity
    # (stochastic training dropout not reproduced).
    B, T, F = x.shape
    H = n_hidden
    F_pad = _ru(F, LANE)
    H_pad = _ru(H, LANE)
    n_out = params["b_out"].shape[1]
    N_pad = _ru(n_out, LANE)

    BT = min(_ru(B, SUBLANE), MAX_BATCH_TILE)
    B_pad = _ru(B, BT)
    n_tiles = B_pad // BT

    # (n_tiles, T*BT, F_pad): batch-tiled, time-major within each tile, bf16.
    xt = jnp.transpose(x, (1, 0, 2))                       # (T, B, F)
    xt = _pad_to(xt, (T, B_pad, F_pad))
    xt = xt.reshape(T, n_tiles, BT, F_pad).transpose(1, 0, 2, 3)
    xt = xt.reshape(n_tiles, T * BT, F_pad).astype(jnp.bfloat16)

    x_spec = pl.BlockSpec((None, T * BT, F_pad), lambda j: (j, 0, 0))
    out_spec = pl.BlockSpec((None, BT, N_pad), lambda j: (j, 0, 0))
    out_shape = jax.ShapeDtypeStruct((n_tiles, BT, N_pad), jnp.float32)
    cparams = pltpu.CompilerParams(dimension_semantics=("parallel",))

    if cell_type == "mlp":
        args = [xt]
        for li, (w, b) in enumerate(params["layers"]):
            in_pad = F_pad if li == 0 else H_pad
            args.append(_pad_to(w, (in_pad, H_pad)).astype(jnp.bfloat16))
            args.append(_pad_to(b, (1, H_pad)))
        # final linear rows are indexed by t*H + j; re-layout to t*H_pad + j
        w_out = params["w_out"].reshape(T, H, n_out)
        w_out = _pad_to(w_out, (T, H_pad, N_pad)).reshape(T * H_pad, N_pad)
        args.append(w_out.astype(jnp.bfloat16))
        args.append(_pad_to(params["b_out"], (1, N_pad)))

        out = pl.pallas_call(
            _make_mlp_kernel(len(params["layers"]), T, BT, H_pad),
            out_shape=out_shape,
            grid=(n_tiles,),
            in_specs=[x_spec] + [_const_spec(a) for a in args[1:]],
            out_specs=out_spec,
            compiler_params=cparams,
        )(*args)
        return out.reshape(n_tiles * BT, N_pad)[:B, :n_out]

    G = 4 if cell_type == "lstm" else 1
    # LSTM gates repacked (i, f, g, o) -> (i, f, o, g): one sigmoid slab + one
    # tanh slab, each lane-aligned to 128.
    perm = [0, 1, 3, 2] if cell_type == "lstm" else list(range(G))
    args = [xt]
    for li, (w_ih, w_hh, b_ih, b_hh) in enumerate(params["layers"]):
        in_dim = w_ih.shape[0]
        in_pad = F_pad if li == 0 else H_pad
        w_ih_p = _pad_to(w_ih.reshape(in_dim, G, H)[:, perm, :],
                         (in_pad, G, H_pad)).reshape(in_pad, G * H_pad)
        w_hh_p = _pad_to(w_hh.reshape(H, G, H)[:, perm, :],
                         (H_pad, G, H_pad)).reshape(H_pad, G * H_pad)
        b_p = _pad_to((b_ih + b_hh).reshape(1, G, H)[:, perm, :],
                      (1, G, H_pad)).reshape(1, G * H_pad)
        args += [w_ih_p.astype(jnp.bfloat16), w_hh_p.astype(jnp.bfloat16), b_p]
    args.append(_pad_to(params["w_out"], (H_pad, N_pad)).astype(jnp.bfloat16))
    args.append(_pad_to(params["b_out"], (1, N_pad)))

    # TODO(synk): for large H on v7x (64 MiB VMEM), stream W_ih/W_hh per layer
    # (emit_pipeline or a layer grid axis) instead of whole-resident weights;
    # at the tested sizes the total VMEM footprint is well under the default.
    scratch = [pltpu.VMEM((T * BT, G * H_pad), jnp.float32),  # hoisted x @ W_ih
               pltpu.VMEM((T * BT, H_pad), jnp.float32)]      # inter-layer seq
    out = pl.pallas_call(
        _make_recurrent_kernel(cell_type, len(params["layers"]), T, BT, H_pad),
        out_shape=out_shape,
        grid=(n_tiles,),
        in_specs=[x_spec] + [_const_spec(a) for a in args[1:]],
        out_specs=out_spec,
        scratch_shapes=scratch,
        compiler_params=cparams,
    )(*args)
    return out.reshape(n_tiles * BT, N_pad)[:B, :n_out]


# --------------------------- pure-JAX reference -----------------------------

def _mm(a, b):
    return jnp.dot(a, b, precision=lax.Precision.HIGHEST)


def presnet_forward_ref(cell_type, params, x, n_hidden):
    B, T, _ = x.shape
    H = n_hidden
    if cell_type == "mlp":
        h = x
        for w, b in params["layers"]:
            h = jax.nn.relu(_mm(h, w) + b)
        h = h.reshape(B, -1)
        return _mm(h, params["w_out"]) + params["b_out"]
    seq = x
    for (w_ih, w_hh, b_ih, b_hh) in params["layers"]:
        h = jnp.zeros((B, H), jnp.float32)
        c = jnp.zeros((B, H), jnp.float32)
        outs = []
        for t in range(T):
            g = _mm(seq[:, t], w_ih) + _mm(h, w_hh) + b_ih + b_hh
            if cell_type == "lstm":
                i = jax.nn.sigmoid(g[:, :H])
                f = jax.nn.sigmoid(g[:, H:2 * H])
                gg = jnp.tanh(g[:, 2 * H:3 * H])
                o = jax.nn.sigmoid(g[:, 3 * H:])
                c = f * c + i * gg
                h = o * jnp.tanh(c)
            else:
                h = jnp.tanh(g)
            outs.append(h)
        seq = jnp.stack(outs, axis=1)
    return _mm(seq[:, -1], params["w_out"]) + params["b_out"]


# ------------------------------ parameter init ------------------------------

def init_params(key, cell_type, n_prices, n_features, n_steps, n_hidden, n_layers):
    def u(k, shape, fan_in):
        bound = 1.0 / math.sqrt(fan_in)
        return jax.random.uniform(k, shape, jnp.float32, -bound, bound)

    keys = jax.random.split(key, 8 * n_layers + 4)
    ki = iter(keys)
    layers = []
    if cell_type == "mlp":
        n_in = n_features
        for _ in range(n_layers):
            w = u(next(ki), (n_in, n_hidden), n_in)
            b = u(next(ki), (1, n_hidden), n_in)
            layers.append((w, b))
            n_in = n_hidden
        fan = n_hidden * n_steps
        w_out = u(next(ki), (fan, n_prices - 1), fan)
        b_out = u(next(ki), (1, n_prices - 1), fan)
    else:
        g = 4 if cell_type == "lstm" else 1
        n_in = n_features
        for _ in range(n_layers):
            w_ih = u(next(ki), (n_in, g * n_hidden), n_hidden)
            w_hh = u(next(ki), (n_hidden, g * n_hidden), n_hidden)
            b_ih = u(next(ki), (1, g * n_hidden), n_hidden)
            b_hh = u(next(ki), (1, g * n_hidden), n_hidden)
            layers.append((w_ih, w_hh, b_ih, b_hh))
            n_in = n_hidden
        w_out = u(next(ki), (n_hidden, n_prices - 1), n_hidden)
        b_out = u(next(ki), (1, n_prices - 1), n_hidden)
    return {"layers": layers, "w_out": w_out, "b_out": b_out}


# ----------------------------------- main -----------------------------------

if __name__ == "__main__":
    B, n_prices, n_features, n_steps, n_hidden, n_layers = 2, 5, 6, 8, 32, 2
    key = jax.random.PRNGKey(0)
    kx, kp = jax.random.split(key)
    x = jax.random.normal(kx, (B, n_steps, n_features), jnp.float32)

    # Tolerance tracks the kernel dtype: matmul operands are bf16 (MXU-native)
    # while the reference runs f32 @ Precision.HIGHEST.
    TOL = 5e-2
    for cell_type in ("mlp", "rnn", "lstm"):
        params = init_params(kp, cell_type, n_prices, n_features,
                             n_steps, n_hidden, n_layers)
        out = presnet_forward_pallas(cell_type, params, x, n_hidden)
        out = jax.block_until_ready(out)
        ref = presnet_forward_ref(cell_type, params, x, n_hidden)
        assert out.shape == (B, n_prices - 1), (cell_type, out.shape)
        err = float(jnp.max(jnp.abs(out - ref)))
        if not (err < TOL):
            raise AssertionError(f"{cell_type}: max abs err {err}")

    print("KERNEL_OK")
</pallas_src>

<mosaic_0001>
module attributes {stable_mosaic.version = 11 : i64} {
  func.func @kernel(%arg0: i32, %arg1: memref<1x64x128xbf16, #tpu.memory_space<vmem>>, %arg2: memref<128x128xbf16, #tpu.memory_space<vmem>>, %arg3: memref<1x128xf32, #tpu.memory_space<vmem>>, %arg4: memref<128x128xbf16, #tpu.memory_space<vmem>>, %arg5: memref<1x128xf32, #tpu.memory_space<vmem>>, %arg6: memref<1024x128xbf16, #tpu.memory_space<vmem>>, %arg7: memref<1x128xf32, #tpu.memory_space<vmem>>, %arg8: memref<1x8x128xf32, #tpu.memory_space<vmem>>) attributes {dimension_semantics = [#tpu.dimension_semantics<parallel>], iteration_bounds = array<i64: 1>, scalar_prefetch = 0 : i64, scratch_operands = 0 : i64, tpu.core_type = #tpu.core_type<tc>, window_params = [{transform_indices = @transform_0, window_bounds = array<i64: 1, 64, 128>}, {pipeline_mode = #tpu.pipeline_mode<synchronous>, transform_indices = @transform_1, window_bounds = array<i64: 128, 128>}, {pipeline_mode = #tpu.pipeline_mode<synchronous>, transform_indices = @transform_2, window_bounds = array<i64: 1, 128>}, {pipeline_mode = #tpu.pipeline_mode<synchronous>, transform_indices = @transform_3, window_bounds = array<i64: 128, 128>}, {pipeline_mode = #tpu.pipeline_mode<synchronous>, transform_indices = @transform_4, window_bounds = array<i64: 1, 128>}, {pipeline_mode = #tpu.pipeline_mode<synchronous>, transform_indices = @transform_5, window_bounds = array<i64: 1024, 128>}, {pipeline_mode = #tpu.pipeline_mode<synchronous>, transform_indices = @transform_6, window_bounds = array<i64: 1, 128>}, {transform_indices = @transform_7, window_bounds = array<i64: 1, 8, 128>}]} {
    %c0 = arith.constant 0 : index
    %c0_0 = arith.constant 0 : index
    %c0_1 = arith.constant 0 : index
    %0 = vector.load %arg1[%c0, %c0_0, %c0_1] : memref<1x64x128xbf16, #tpu.memory_space<vmem>>, vector<1x64x128xbf16>
    %1 = vector.shape_cast %0 : vector<1x64x128xbf16> to vector<64x128xbf16>
    %c0_2 = arith.constant 0 : index
    %c0_3 = arith.constant 0 : index
    %2 = vector.load %arg3[%c0_2, %c0_3] : memref<1x128xf32, #tpu.memory_space<vmem>>, vector<1x128xf32>
    %c0_4 = arith.constant 0 : index
    %c0_5 = arith.constant 0 : index
    %3 = vector.load %arg2[%c0_4, %c0_5] : memref<128x128xbf16, #tpu.memory_space<vmem>>, vector<128x128xbf16>
    %cst = arith.constant dense<0.000000e+00> : vector<64x128xf32>
    %4 = tpu.matmul %1, %3, %cst {dimension_numbers = #tpu.dot_dimension_numbers<[1], [0], [0], [1], [0, 0, 1, 1], [], []>} : vector<64x128xbf16>, vector<128x128xbf16>, vector<64x128xf32> -> vector<64x128xf32>
    %5 = vector.broadcast %2 : vector<1x128xf32> to vector<64x128xf32>
    %6 = arith.addf %4, %5 : vector<64x128xf32>
    %cst_6 = arith.constant 0.000000e+00 : f32
    %7 = vector.broadcast %cst_6 : f32 to vector<64x128xf32>
    %8 = arith.maximumf %6, %7 : vector<64x128xf32>
    %c0_7 = arith.constant 0 : index
    %c0_8 = arith.constant 0 : index
    %9 = vector.load %arg5[%c0_7, %c0_8] : memref<1x128xf32, #tpu.memory_space<vmem>>, vector<1x128xf32>
    %10 = arith.truncf %8 : vector<64x128xf32> to vector<64x128xbf16>
    %c0_9 = arith.constant 0 : index
    %c0_10 = arith.constant 0 : index
    %11 = vector.load %arg4[%c0_9, %c0_10] : memref<128x128xbf16, #tpu.memory_space<vmem>>, vector<128x128xbf16>
    %cst_11 = arith.constant dense<0.000000e+00> : vector<64x128xf32>
    %12 = tpu.matmul %10, %11, %cst_11 {dimension_numbers = #tpu.dot_dimension_numbers<[1], [0], [0], [1], [0, 0, 1, 1], [], []>} : vector<64x128xbf16>, vector<128x128xbf16>, vector<64x128xf32> -> vector<64x128xf32>
    %13 = vector.broadcast %9 : vector<1x128xf32> to vector<64x128xf32>
    %14 = arith.addf %12, %13 : vector<64x128xf32>
    %cst_12 = arith.constant 0.000000e+00 : f32
    %15 = vector.broadcast %cst_12 : f32 to vector<64x128xf32>
    %16 = arith.maximumf %14, %15 : vector<64x128xf32>
    %c0_13 = arith.constant 0 : index
    %c0_14 = arith.constant 0 : index
    %17 = vector.load %arg7[%c0_13, %c0_14] : memref<1x128xf32, #tpu.memory_space<vmem>>, vector<1x128xf32>
    %18 = vector.shape_cast %17 : vector<1x128xf32> to vector<1x128xf32>
    %19 = vector.broadcast %18 : vector<1x128xf32> to vector<8x128xf32>
    %20 = vector.extract_strided_slice %16 {offsets = [0, 0], sizes = [8, 128], strides = [1, 1]} : vector<64x128xf32> to vector<8x128xf32>
    %21 = arith.truncf %20 : vector<8x128xf32> to vector<8x128xbf16>
    %c0_15 = arith.constant 0 : index
    %c0_16 = arith.constant 0 : index
    %22 = vector.load %arg6[%c0_15, %c0_16] : memref<1024x128xbf16, #tpu.memory_space<vmem>>, vector<128x128xbf16>
    %cst_17 = arith.constant dense<0.000000e+00> : vector<8x128xf32>
    %23 = tpu.matmul %21, %22, %cst_17 {dimension_numbers = #tpu.dot_dimension_numbers<[1], [0], [0], [1], [0, 0, 1, 1], [], []>} : vector<8x128xbf16>, vector<128x128xbf16>, vector<8x128xf32> -> vector<8x128xf32>
    %24 = arith.addf %19, %23 : vector<8x128xf32>
    %25 = vector.extract_strided_slice %16 {offsets = [8, 0], sizes = [8, 128], strides = [1, 1]} : vector<64x128xf32> to vector<8x128xf32>
    %26 = arith.truncf %25 : vector<8x128xf32> to vector<8x128xbf16>
    %c128 = arith.constant 128 : index
    %c0_18 = arith.constant 0 : index
    %27 = vector.load %arg6[%c128, %c0_18] : memref<1024x128xbf16, #tpu.memory_space<vmem>>, vector<128x128xbf16>
    %cst_19 = arith.constant dense<0.000000e+00> : vector<8x128xf32>
    %28 = tpu.matmul %26, %27, %cst_19 {dimension_numbers = #tpu.dot_dimension_numbers<[1], [0], [0], [1], [0, 0, 1, 1], [], []>} : vector<8x128xbf16>, vector<128x128xbf16>, vector<8x128xf32> -> vector<8x128xf32>
    %29 = arith.addf %24, %28 : vector<8x128xf32>
    %30 = vector.extract_strided_slice %16 {offsets = [16, 0], sizes = [8, 128], strides = [1, 1]} : vector<64x128xf32> to vector<8x128xf32>
    %31 = arith.truncf %30 : vector<8x128xf32> to vector<8x128xbf16>
    %c256 = arith.constant 256 : index
    %c0_20 = arith.constant 0 : index
    %32 = vector.load %arg6[%c256, %c0_20] : memref<1024x128xbf16, #tpu.memory_space<vmem>>, vector<128x128xbf16>
    %cst_21 = arith.constant dense<0.000000e+00> : vector<8x128xf32>
    %33 = tpu.matmul %31, %32, %cst_21 {dimension_numbers = #tpu.dot_dimension_numbers<[1], [0], [0], [1], [0, 0, 1, 1], [], []>} : vector<8x128xbf16>, vector<128x128xbf16>, vector<8x128xf32> -> vector<8x128xf32>
    %34 = arith.addf %29, %33 : vector<8x128xf32>
    %35 = vector.extract_strided_slice %16 {offsets = [24, 0], sizes = [8, 128], strides = [1, 1]} : vector<64x128xf32> to vector<8x128xf32>
    %36 = arith.truncf %35 : vector<8x128xf32> to vector<8x128xbf16>
    %c384 = arith.constant 384 : index
    %c0_22 = arith.constant 0 : index
    %37 = vector.load %arg6[%c384, %c0_22] : memref<1024x128xbf16, #tpu.memory_space<vmem>>, vector<128x128xbf16>
    %cst_23 = arith.constant dense<0.000000e+00> : vector<8x128xf32>
    %38 = tpu.matmul %36, %37, %cst_23 {dimension_numbers = #tpu.dot_dimension_numbers<[1], [0], [0], [1], [0, 0, 1, 1], [], []>} : vector<8x128xbf16>, vector<128x128xbf16>, vector<8x128xf32> -> vector<8x128xf32>
    %39 = arith.addf %34, %38 : vector<8x128xf32>
    %40 = vector.extract_strided_slice %16 {offsets = [32, 0], sizes = [8, 128], strides = [1, 1]} : vector<64x128xf32> to vector<8x128xf32>
    %41 = arith.truncf %40 : vector<8x128xf32> to vector<8x128xbf16>
    %c512 = arith.constant 512 : index
    %c0_24 = arith.constant 0 : index
    %42 = vector.load %arg6[%c512, %c0_24] : memref<1024x128xbf16, #tpu.memory_space<vmem>>, vector<128x128xbf16>
    %cst_25 = arith.constant dense<0.000000e+00> : vector<8x128xf32>
    %43 = tpu.matmul %41, %42, %cst_25 {dimension_numbers = #tpu.dot_dimension_numbers<[1], [0], [0], [1], [0, 0, 1, 1], [], []>} : vector<8x128xbf16>, vector<128x128xbf16>, vector<8x128xf32> -> vector<8x128xf32>
    %44 = arith.addf %39, %43 : vector<8x128xf32>
    %45 = vector.extract_strided_slice %16 {offsets = [40, 0], sizes = [8, 128], strides = [1, 1]} : vector<64x128xf32> to vector<8x128xf32>
    %46 = arith.truncf %45 : vector<8x128xf32> to vector<8x128xbf16>
    %c640 = arith.constant 640 : index
    %c0_26 = arith.constant 0 : index
    %47 = vector.load %arg6[%c640, %c0_26] : memref<1024x128xbf16, #tpu.memory_space<vmem>>, vector<128x128xbf16>
    %cst_27 = arith.constant dense<0.000000e+00> : vector<8x128xf32>
    %48 = tpu.matmul %46, %47, %cst_27 {dimension_numbers = #tpu.dot_dimension_numbers<[1], [0], [0], [1], [0, 0, 1, 1], [], []>} : vector<8x128xbf16>, vector<128x128xbf16>, vector<8x128xf32> -> vector<8x128xf32>
    %49 = arith.addf %44, %48 : vector<8x128xf32>
    %50 = vector.extract_strided_slice %16 {offsets = [48, 0], sizes = [8, 128], strides = [1, 1]} : vector<64x128xf32> to vector<8x128xf32>
    %51 = arith.truncf %50 : vector<8x128xf32> to vector<8x128xbf16>
    %c768 = arith.constant 768 : index
    %c0_28 = arith.constant 0 : index
    %52 = vector.load %arg6[%c768, %c0_28] : memref<1024x128xbf16, #tpu.memory_space<vmem>>, vector<128x128xbf16>
    %cst_29 = arith.constant dense<0.000000e+00> : vector<8x128xf32>
    %53 = tpu.matmul %51, %52, %cst_29 {dimension_numbers = #tpu.dot_dimension_numbers<[1], [0], [0], [1], [0, 0, 1, 1], [], []>} : vector<8x128xbf16>, vector<128x128xbf16>, vector<8x128xf32> -> vector<8x128xf32>
    %54 = arith.addf %49, %53 : vector<8x128xf32>
    %55 = vector.extract_strided_slice %16 {offsets = [56, 0], sizes = [8, 128], strides = [1, 1]} : vector<64x128xf32> to vector<8x128xf32>
    %56 = arith.truncf %55 : vector<8x128xf32> to vector<8x128xbf16>
    %c896 = arith.constant 896 : index
    %c0_30 = arith.constant 0 : index
    %57 = vector.load %arg6[%c896, %c0_30] : memref<1024x128xbf16, #tpu.memory_space<vmem>>, vector<128x128xbf16>
    %cst_31 = arith.constant dense<0.000000e+00> : vector<8x128xf32>
    %58 = tpu.matmul %56, %57, %cst_31 {dimension_numbers = #tpu.dot_dimension_numbers<[1], [0], [0], [1], [0, 0, 1, 1], [], []>} : vector<8x128xbf16>, vector<128x128xbf16>, vector<8x128xf32> -> vector<8x128xf32>
    %59 = arith.addf %54, %58 : vector<8x128xf32>
    %c0_32 = arith.constant 0 : index
    %c0_33 = arith.constant 0 : index
    %c0_34 = arith.constant 0 : index
    %60 = vector.load %arg8[%c0_32, %c0_33, %c0_34] : memref<1x8x128xf32, #tpu.memory_space<vmem>>, vector<1x8x128xf32>
    %61 = vector.shape_cast %60 : vector<1x8x128xf32> to vector<8x128xf32>
    %62 = vector.shape_cast %59 : vector<8x128xf32> to vector<1x8x128xf32>
    tpu.vector_store %arg8[%c0_32, %c0_33, %c0_34], %62 {strides = array<i32>} : memref<1x8x128xf32, #tpu.memory_space<vmem>>, vector<1x8x128xf32>,
    return
  }
  func.func @transform_0(%arg0: i32) -> (i32, i32, i32) {
    %c0_i32 = arith.constant 0 : i32
    %c0_i32_0 = arith.constant 0 : i32
    %c0_i32_1 = arith.constant 0 : i32
    return %arg0, %c0_i32, %c0_i32_0 : i32, i32, i32
  }
  func.func @transform_1(%arg0: i32) -> (i32, i32) {
    %c0_i32 = arith.constant 0 : i32
    %c0_i32_0 = arith.constant 0 : i32
    %c0_i32_1 = arith.constant 0 : i32
    return %c0_i32, %c0_i32_0 : i32, i32
  }
  func.func @transform_2(%arg0: i32) -> (i32, i32) {
    %c0_i32 = arith.constant 0 : i32
    %c0_i32_0 = arith.constant 0 : i32
    %c0_i32_1 = arith.constant 0 : i32
    return %c0_i32, %c0_i32_0 : i32, i32
  }
  func.func @transform_3(%arg0: i32) -> (i32, i32) {
    %c0_i32 = arith.constant 0 : i32
    %c0_i32_0 = arith.constant 0 : i32
    %c0_i32_1 = arith.constant 0 : i32
    return %c0_i32, %c0_i32_0 : i32, i32
  }
  func.func @transform_4(%arg0: i32) -> (i32, i32) {
    %c0_i32 = arith.constant 0 : i32
    %c0_i32_0 = arith.constant 0 : i32
    %c0_i32_1 = arith.constant 0 : i32
    return %c0_i32, %c0_i32_0 : i32, i32
  }
  func.func @transform_5(%arg0: i32) -> (i32, i32) {
    %c0_i32 = arith.constant 0 : i32
    %c0_i32_0 = arith.constant 0 : i32
    %c0_i32_1 = arith.constant 0 : i32
    return %c0_i32, %c0_i32_0 : i32, i32
  }
  func.func @transform_6(%arg0: i32) -> (i32, i32) {
    %c0_i32 = arith.constant 0 : i32
    %c0_i32_0 = arith.constant 0 : i32
    %c0_i32_1 = arith.constant 0 : i32
    return %c0_i32, %c0_i32_0 : i32, i32
  }
  func.func @transform_7(%arg0: i32) -> (i32, i32, i32) {
    %c0_i32 = arith.constant 0 : i32
    %c0_i32_0 = arith.constant 0 : i32
    %c0_i32_1 = arith.constant 0 : i32
    return %arg0, %c0_i32, %c0_i32_0 : i32, i32, i32
  }
}

</mosaic_0001>

<llo_original>
// kernel: tpu_custom_call.1
$region0: #{tpu_custom_call.1}
  #allocation0 [shape = 'u32[]', space=smem, size = 0x4, offset = 0x4, fixed_abs, tag = 'smem constant byte address 0x4 - core index']
  #allocation1 [shape = 'u32[144,128]{1,0:T(1,128)}', space=vmem, size = 0x12000, scoped, tag = 'internal scratch']
  %s0 = inlined_call_operand.hbm [shape: bf16[1,64,128], index: 0, kind: input, shape index: {}]
  %s1 = inlined_call_operand.hbm [shape: bf16[128,128], index: 1, kind: input, shape index: {}]
  %s2 = inlined_call_operand.vmem [shape: f32[1,128], index: 2, kind: input, shape index: {}]
  %s3 = inlined_call_operand.hbm [shape: bf16[128,128], index: 3, kind: input, shape index: {}]
  %s4 = inlined_call_operand.vmem [shape: f32[1,128], index: 4, kind: input, shape index: {}]
  %s5 = inlined_call_operand.hbm [shape: bf16[1024,128], index: 5, kind: input, shape index: {}]
  %s6 = inlined_call_operand.vmem [shape: f32[1,128], index: 6, kind: input, shape index: {}]
  %s7 = inlined_call_operand.hbm [shape: f32[1,8,128], index: 7, kind: output, shape index: {}]
  %s8 = sld [smem:[#allocation0]]
  $region54: #{tpu_custom_call.1} parent=0
    _
  %s10 = ssub.s32 1, %s8
  %s11 = scalar_select 0, %s10, %s8
  $region1: #{tpu_custom_call.1} parent=0
    #allocation2 [shape = 'u8[16384]{0}', space=vmem, size = 0x4000, scoped, tag = 'input window, operand 0, single buffered']
    #allocation3 [shape = 's32[1]{0}', space=sflag, size = 0x4, scoped, tag = 'scoped memory for tpu_custom_call.1']
    #allocation4 [shape = 's32[1]{0}', space=sflag, size = 0x4, scoped, tag = 'scoped memory for tpu_custom_call.1']
    #allocation5 [shape = 'u8[32768]{0}', space=vmem, size = 0x8000, scoped, tag = 'input window, operand 1, single buffered']
    #allocation6 [shape = 's32[1]{0}', space=sflag, size = 0x4, scoped, tag = 'scoped memory for tpu_custom_call.1']
    #allocation7 [shape = 'u8[32768]{0}', space=vmem, size = 0x8000, scoped, tag = 'input window, operand 3, single buffered']
    #allocation8 [shape = 'u8[262144]{0}', space=vmem, size = 0x40000, scoped, tag = 'input window, operand 5, single buffered']
    #allocation9 [shape = 's32[1]{0}', space=sflag, size = 0x4, scoped, tag = 'scoped memory for tpu_custom_call.1']
    #allocation10 [shape = 'u8[4096]{0}', space=vmem, size = 0x1000, scoped, tag = 'output window, operand 0, single buffered']
    %12 = vsyncpa [#allocation3], 0
    %13 = vsyncpa [#allocation6], 0
    %14 = vsyncpa [#allocation9], 0
    %15 = vsyncpa [#allocation4], 0
    // Predicated region
    $region2: #{tpu_custom_call.1} parent=1 // pred_check
      _
    $region3: #{tpu_custom_call.1} parent=1 // pred_check_branch
      %17 = sbr.rel (0) target = $region5
    $region4: #{tpu_custom_call.1} parent=1 // pred_region
      %s19 = ssub.s32 512, 512
      %20 = vsyncadd [#allocation3], %s19
      %s21 = sshll.u32 [#allocation2], 4
      %s22 = int_to_ptr.vmem [resolvable:$true] %s21
      %27 = dma.hbm_to_vmem [thread:$0]  %s0, 512, %s22, [#allocation3], 64, 64, 4
    $region5: #{tpu_custom_call.1} parent=1 // pred_fallthru
      _
    // Predicated region
    $region6: #{tpu_custom_call.1} parent=1 // pred_check
      _
    $region7: #{tpu_custom_call.1} parent=1 // pred_check_branch
      %29 = sbr.rel (0) target = $region9
    $region8: #{tpu_custom_call.1} parent=1 // pred_region
      %s31 = ssub.s32 1024, 1024
      %32 = vsyncadd [#allocation6], %s31
      %s33 = sshll.u32 [#allocation5], 4
      %s34 = int_to_ptr.vmem [resolvable:$true] %s33
      %39 = dma.hbm_to_vmem [thread:$0]  %s1, 1024, %s34, [#allocation6], 64, 64, 4
    $region9: #{tpu_custom_call.1} parent=1 // pred_fallthru
      _
    // Predicated region
    $region10: #{tpu_custom_call.1} parent=1 // pred_check
      _
    $region11: #{tpu_custom_call.1} parent=1 // pred_check_branch
      %41 = sbr.rel (0) target = $region13
    $region12: #{tpu_custom_call.1} parent=1 // pred_region
      _
    $region13: #{tpu_custom_call.1} parent=1 // pred_fallthru
      _
    // Predicated region
    $region14: #{tpu_custom_call.1} parent=1 // pred_check
      _
    $region15: #{tpu_custom_call.1} parent=1 // pred_check_branch
      %43 = sbr.rel (0) target = $region17
    $region16: #{tpu_custom_call.1} parent=1 // pred_region
      %s45 = ssub.s32 1024, 1024
      %46 = vsyncadd [#allocation6], %s45
      %s47 = sshll.u32 [#allocation7], 4
      %s48 = int_to_ptr.vmem [resolvable:$true] %s47
      %53 = dma.hbm_to_vmem [thread:$0]  %s3, 1024, %s48, [#allocation6], 64, 64, 4
    $region17: #{tpu_custom_call.1} parent=1 // pred_fallthru
      _
    // Predicated region
    $region18: #{tpu_custom_call.1} parent=1 // pred_check
      _
    $region19: #{tpu_custom_call.1} parent=1 // pred_check_branch
      %55 = sbr.rel (0) target = $region21
    $region20: #{tpu_custom_call.1} parent=1 // pred_region
      _
    $region21: #{tpu_custom_call.1} parent=1 // pred_fallthru
      _
    // Predicated region
    $region22: #{tpu_custom_call.1} parent=1 // pred_check
      _
    $region23: #{tpu_custom_call.1} parent=1 // pred_check_branch
      %57 = sbr.rel (0) target = $region25
    $region24: #{tpu_custom_call.1} parent=1 // pred_region
      %s59 = ssub.s32 8192, 8192
      %60 = vsyncadd [#allocation9], %s59
      %s61 = sshll.u32 [#allocation8], 4
      %s62 = int_to_ptr.vmem [resolvable:$true] %s61
      %67 = dma.hbm_to_vmem [thread:$0]  %s5, 8192, %s62, [#allocation9], 64, 64, 4
    $region25: #{tpu_custom_call.1} parent=1 // pred_fallthru
      _
    // Predicated region
    $region26: #{tpu_custom_call.1} parent=1 // pred_check
      _
    $region27: #{tpu_custom_call.1} parent=1 // pred_check_branch
      %69 = sbr.rel (0) target = $region29
    $region28: #{tpu_custom_call.1} parent=1 // pred_region
      _
    $region29: #{tpu_custom_call.1} parent=1 // pred_fallthru
      _
    // Predicated region
    $region30: #{tpu_custom_call.1} parent=1 // pred_check
      _
    $region31: #{tpu_custom_call.1} parent=1 // pred_check_branch
      %71 = sbr.rel (0) target = $region33
    $region32: #{tpu_custom_call.1} parent=1 // pred_region
      %72 = dma.done [#allocation3], 512
    $region33: #{tpu_custom_call.1} parent=1 // pred_fallthru
      _
    // Predicated region
    $region34: #{tpu_custom_call.1} parent=1 // pred_check
      _
    $region35: #{tpu_custom_call.1} parent=1 // pred_check_branch
      %74 = sbr.rel (0) target = $region37
    $region36: #{tpu_custom_call.1} parent=1 // pred_region
      %75 = dma.done [#allocation6], 1024
    $region37: #{tpu_custom_call.1} parent=1 // pred_fallthru
      _
    // Predicated region
    $region38: #{tpu_custom_call.1} parent=1 // pred_check
      _
    $region39: #{tpu_custom_call.1} parent=1 // pred_check_branch
      %77 = sbr.rel (0) target = $region41
    $region40: #{tpu_custom_call.1} parent=1 // pred_region
      %78 = dma.done [#allocation6], 1024
    $region41: #{tpu_custom_call.1} parent=1 // pred_fallthru
      _
    // Predicated region
    $region42: #{tpu_custom_call.1} parent=1 // pred_check
      _
    $region43: #{tpu_custom_call.1} parent=1 // pred_check_branch
      %80 = sbr.rel (0) target = $region45
    $region44: #{tpu_custom_call.1} parent=1 // pred_region
      %81 = dma.done [#allocation9], 8192
    $region45: #{tpu_custom_call.1} parent=1 // pred_fallthru
      _
    %v83 = vld [vmem:[#allocation2] sm:$0xf]
    %v84 = vld [vmem:[#allocation2 + $0x4] sm:$0xf]
    %v85 = vld [vmem:[#allocation2 + $0x8] sm:$0xf]
    %v86 = vld [vmem:[#allocation2 + $0xc] sm:$0xf]
    %v87 = vld [vmem:[#allocation2 + $0x10] sm:$0xf]
    %v88 = vld [vmem:[#allocation2 + $0x14] sm:$0xf]
    %v89 = vld [vmem:[#allocation2 + $0x18] sm:$0xf]
    %v90 = vld [vmem:[#allocation2 + $0x1c] sm:$0xf]
    %v91 = vld [vmem:[%s2] sm:$0x1]
    %v92 = vld [vmem:[#allocation5] sm:$0xf]
    %v93 = vld [vmem:[#allocation5 + $0x4] sm:$0xf]
    %v94 = vld [vmem:[#allocation5 + $0x8] sm:$0xf]
    %v95 = vld [vmem:[#allocation5 + $0xc] sm:$0xf]
    %v96 = vld [vmem:[#allocation5 + $0x10] sm:$0xf]
    %v97 = vld [vmem:[#allocation5 + $0x14] sm:$0xf]
    %v98 = vld [vmem:[#allocation5 + $0x18] sm:$0xf]
    %v99 = vld [vmem:[#allocation5 + $0x1c] sm:$0xf]
    %v100 = vld [vmem:[#allocation5 + $0x20] sm:$0xf]
    %v101 = vld [vmem:[#allocation5 + $0x24] sm:$0xf]
    %v102 = vld [vmem:[#allocation5 + $0x28] sm:$0xf]
    %v103 = vld [vmem:[#allocation5 + $0x2c] sm:$0xf]
    %v104 = vld [vmem:[#allocation5 + $0x30] sm:$0xf]
    %v105 = vld [vmem:[#allocation5 + $0x34] sm:$0xf]
    %v106 = vld [vmem:[#allocation5 + $0x38] sm:$0xf]
    %v107 = vld [vmem:[#allocation5 + $0x3c] sm:$0xf]
    %v109 = vlaneseq
    %v110 = vshrl.u32 %v109, 7
    %v111 = vsub.s32 0, %v110
    %v112 = vrot.slane %v91, %v111
    %v122 = vunpack.c.l.b16 %v83
    %v123 = vunpack.c.l.b16 %v84
    %v124 = vunpack.c.l.b16 %v85
    %v125 = vunpack.c.l.b16 %v86
    %v126 = vunpack.c.l.b16 %v87
    %v127 = vunpack.c.l.b16 %v88
    %v128 = vunpack.c.l.b16 %v89
    %v129 = vunpack.c.l.b16 %v90
    %v130 = vpack.c.b16 %v123, %v122
    %v131 = vpack.c.b16 %v125, %v124
    %v132 = vpack.c.b16 %v127, %v126
    %v133 = vpack.c.b16 %v129, %v128
    %v154 = vunpack.c.l.b16 %v92
    %v155 = vunpack.c.l.b16 %v93
    %v156 = vunpack.c.l.b16 %v94
    %v157 = vunpack.c.l.b16 %v95
    %v158 = vunpack.c.l.b16 %v96
    %v159 = vunpack.c.l.b16 %v97
    %v160 = vunpack.c.l.b16 %v98
    %v161 = vunpack.c.l.b16 %v99
    %v162 = vunpack.c.l.b16 %v100
    %v163 = vunpack.c.l.b16 %v101
    %v164 = vunpack.c.l.b16 %v102
    %v165 = vunpack.c.l.b16 %v103
    %v166 = vunpack.c.l.b16 %v104
    %v167 = vunpack.c.l.b16 %v105
    %v168 = vunpack.c.l.b16 %v106
    %v169 = vunpack.c.l.b16 %v107
    %v170 = vpack.c.b16 %v155, %v154
    %v171 = vpack.c.b16 %v157, %v156
    %v172 = vpack.c.b16 %v159, %v158
    %v173 = vpack.c.b16 %v161, %v160
    %v174 = vpack.c.b16 %v163, %v162
    %v175 = vpack.c.b16 %v165, %v164
    %v176 = vpack.c.b16 %v167, %v166
    %v177 = vpack.c.b16 %v169, %v168
    %186 = vmatprep.subr.bf16.mxu0 0
    %187 = vmatpush1.bf16.msra.mxu0 %v177
    %188 = vmatprep.subr.bf16.mxu0 0
    %189 = vmatpush1.bf16.msra.mxu0 %v176
    %190 = vmatprep.subr.bf16.mxu0 0
    %191 = vmatpush1.bf16.msra.mxu0 %v175
    %192 = vmatprep.subr.bf16.mxu0 0
    %193 = vmatpush1.bf16.msra.mxu0 %v174
    %194 = vmatprep.subr.bf16.mxu0 0
    %195 = vmatpush1.bf16.msra.mxu0 %v173
    %196 = vmatprep.subr.bf16.mxu0 0
    %197 = vmatpush1.bf16.msra.mxu0 %v172
    %198 = vmatprep.subr.bf16.mxu0 0
    %199 = vmatpush1.bf16.msra.mxu0 %v171
    %200 = vmatprep.subr.bf16.mxu0 0
    %201 = vmatpush1.bf16.msra.mxu0 %v170
    %202 = vmatprep.subr.bf16.mxu0 0
    %203 = vmatpush2.bf16.msra.mxu0 0
    %204 = vmatprep.subr.bf16.mxu0 0
    %205 = vmatpush2.bf16.msra.mxu0 0
    %206 = vmatprep.subr.bf16.mxu0 0
    %207 = vmatpush2.bf16.msra.mxu0 0
    %208 = vmatprep.subr.bf16.mxu0 0
    %209 = vmatpush2.bf16.msra.mxu0 0
    %210 = vmatprep.subr.bf16.mxu0 0
    %211 = vmatpush2.bf16.msra.mxu0 0
    %212 = vmatprep.subr.bf16.mxu0 0
    %213 = vmatpush2.bf16.msra.mxu0 0
    %214 = vmatprep.subr.bf16.mxu0 0
    %215 = vmatpush2.bf16.msra.mxu0 0
    %216 = vmatprep.subr.bf16.mxu0 0
    %217 = vmatpush2.bf16.msra.mxu0 0
    %218 = vmatprep.mubr.bf16.mxu0 0
    %219 = vmatmul.mubr.bf16.gmra.mxu0 %v130
    %v220 = vpop.f32.mrf.mxu0
    %v221 = vadd.f32 %v112, %v220
    %v222 = vpop.f32.mrf.mxu0
    %v223 = vpop.f32.mrf.mxu0
    %v224 = vadd.f32 %v112, %v223
    %v225 = vpop.f32.mrf.mxu0
    %226 = vmatprep.mubr.bf16.mxu0 0
    %227 = vmatmul.mubr.bf16.gmra.mxu0 %v131
    %v228 = vpop.f32.mrf.mxu0
    %v229 = vadd.f32 %v112, %v228
    %v230 = vpop.f32.mrf.mxu0
    %v231 = vpop.f32.mrf.mxu0
    %v232 = vadd.f32 %v112, %v231
    %v233 = vpop.f32.mrf.mxu0
    %234 = vmatprep.mubr.bf16.mxu0 0
    %235 = vmatmul.mubr.bf16.gmra.mxu0 %v132
    %v236 = vpop.f32.mrf.mxu0
    %v237 = vadd.f32 %v112, %v236
    %v238 = vpop.f32.mrf.mxu0
    %v239 = vpop.f32.mrf.mxu0
    %v240 = vadd.f32 %v112, %v239
    %v241 = vpop.f32.mrf.mxu0
    %242 = vmatprep.mubr.bf16.mxu0 0
    %243 = vmatmul.mubr.bf16.gmra.mxu0 %v133
    %v244 = vpop.f32.mrf.mxu0
    %v245 = vadd.f32 %v112, %v244
    %v246 = vpop.f32.mrf.mxu0
    %v247 = vpop.f32.mrf.mxu0
    %v248 = vadd.f32 %v112, %v247
    %v249 = vpop.f32.mrf.mxu0
    %250 = vdwg.mxu0
    %v251 = vmax.f32 %v221, 0.0
    %v252 = vmax.f32 %v224, 0.0
    %v253 = vmax.f32 %v229, 0.0
    %v254 = vmax.f32 %v232, 0.0
    %v255 = vmax.f32 %v237, 0.0
    %v256 = vmax.f32 %v240, 0.0
    %v257 = vmax.f32 %v245, 0.0
    %v258 = vmax.f32 %v248, 0.0
    %v259 = vld [vmem:[%s4] sm:$0x1]
    %v260 = vpack.c.bf16 %v252, %v251
    %v261 = vpack.c.bf16 %v254, %v253
    %v262 = vpack.c.bf16 %v256, %v255
    %v263 = vpack.c.bf16 %v258, %v257
    %v264 = vld [vmem:[#allocation7] sm:$0xf]
    %v265 = vld [vmem:[#allocation7 + $0x4] sm:$0xf]
    %v266 = vld [vmem:[#allocation7 + $0x8] sm:$0xf]
    %v267 = vld [vmem:[#allocation7 + $0xc] sm:$0xf]
    %v268 = vld [vmem:[#allocation7 + $0x10] sm:$0xf]
    %v269 = vld [vmem:[#allocation7 + $0x14] sm:$0xf]
    %v270 = vld [vmem:[#allocation7 + $0x18] sm:$0xf]
    %v271 = vld [vmem:[#allocation7 + $0x1c] sm:$0xf]
    %v272 = vld [vmem:[#allocation7 + $0x20] sm:$0xf]
    %v273 = vld [vmem:[#allocation7 + $0x24] sm:$0xf]
    %v274 = vld [vmem:[#allocation7 + $0x28] sm:$0xf]
    %v275 = vld [vmem:[#allocation7 + $0x2c] sm:$0xf]
    %v276 = vld [vmem:[#allocation7 + $0x30] sm:$0xf]
    %v277 = vld [vmem:[#allocation7 + $0x34] sm:$0xf]
    %v278 = vld [vmem:[#allocation7 + $0x38] sm:$0xf]
    %v279 = vld [vmem:[#allocation7 + $0x3c] sm:$0xf]
    %v281 = vlaneseq
    %v282 = vshrl.u32 %v281, 7
    %v283 = vsub.s32 0, %v282
    %v284 = vrot.slane %v259, %v283
    %v302 = vunpack.c.l.b16 %v264
    %v303 = vunpack.c.l.b16 %v265
    %v304 = vunpack.c.l.b16 %v266
    %v305 = vunpack.c.l.b16 %v267
    %v306 = vunpack.c.l.b16 %v268
    %v307 = vunpack.c.l.b16 %v269
    %v308 = vunpack.c.l.b16 %v270
    %v309 = vunpack.c.l.b16 %v271
    %v310 = vunpack.c.l.b16 %v272
    %v311 = vunpack.c.l.b16 %v273
    %v312 = vunpack.c.l.b16 %v274
    %v313 = vunpack.c.l.b16 %v275
    %v314 = vunpack.c.l.b16 %v276
    %v315 = vunpack.c.l.b16 %v277
    %v316 = vunpack.c.l.b16 %v278
    %v317 = vunpack.c.l.b16 %v279
    %v318 = vpack.c.b16 %v303, %v302
    %v319 = vpack.c.b16 %v305, %v304
    %v320 = vpack.c.b16 %v307, %v306
    %v321 = vpack.c.b16 %v309, %v308
    %v322 = vpack.c.b16 %v311, %v310
    %v323 = vpack.c.b16 %v313, %v312
    %v324 = vpack.c.b16 %v315, %v314
    %v325 = vpack.c.b16 %v317, %v316
    %334 = vmatprep.subr.bf16.mxu0 0
    %335 = vmatpush1.bf16.msra.mxu0 %v325
    %336 = vmatprep.subr.bf16.mxu0 0
    %337 = vmatpush1.bf16.msra.mxu0 %v324
    %338 = vmatprep.subr.bf16.mxu0 0
    %339 = vmatpush1.bf16.msra.mxu0 %v323
    %340 = vmatprep.subr.bf16.mxu0 0
    %341 = vmatpush1.bf16.msra.mxu0 %v322
    %342 = vmatprep.subr.bf16.mxu0 0
    %343 = vmatpush1.bf16.msra.mxu0 %v321
    %344 = vmatprep.subr.bf16.mxu0 0
    %345 = vmatpush1.bf16.msra.mxu0 %v320
    %346 = vmatprep.subr.bf16.mxu0 0
    %347 = vmatpush1.bf16.msra.mxu0 %v319
    %348 = vmatprep.subr.bf16.mxu0 0
    %349 = vmatpush1.bf16.msra.mxu0 %v318
    %350 = vmatprep.subr.bf16.mxu0 0
    %351 = vmatpush2.bf16.msra.mxu0 0
    %352 = vmatprep.subr.bf16.mxu0 0
    %353 = vmatpush2.bf16.msra.mxu0 0
    %354 = vmatprep.subr.bf16.mxu0 0
    %355 = vmatpush2.bf16.msra.mxu0 0
    %356 = vmatprep.subr.bf16.mxu0 0
    %357 = vmatpush2.bf16.msra.mxu0 0
    %358 = vmatprep.subr.bf16.mxu0 0
    %359 = vmatpush2.bf16.msra.mxu0 0
    %360 = vmatprep.subr.bf16.mxu0 0
    %361 = vmatpush2.bf16.msra.mxu0 0
    %362 = vmatprep.subr.bf16.mxu0 0
    %363 = vmatpush2.bf16.msra.mxu0 0
    %364 = vmatprep.subr.bf16.mxu0 0
    %365 = vmatpush2.bf16.msra.mxu0 0
    %366 = vmatprep.mubr.bf16.mxu0 0
    %367 = vmatmul.mubr.bf16.gmra.mxu0 %v260
    %v368 = vpop.f32.mrf.mxu0
    %v369 = vadd.f32 %v284, %v368
    %v370 = vpop.f32.mrf.mxu0
    %v371 = vpop.f32.mrf.mxu0
    %v372 = vadd.f32 %v284, %v371
    %v373 = vpop.f32.mrf.mxu0
    %374 = vmatprep.mubr.bf16.mxu0 0
    %375 = vmatmul.mubr.bf16.gmra.mxu0 %v261
    %v376 = vpop.f32.mrf.mxu0
    %v377 = vadd.f32 %v284, %v376
    %v378 = vpop.f32.mrf.mxu0
    %v379 = vpop.f32.mrf.mxu0
    %v380 = vadd.f32 %v284, %v379
    %v381 = vpop.f32.mrf.mxu0
    %382 = vmatprep.mubr.bf16.mxu0 0
    %383 = vmatmul.mubr.bf16.gmra.mxu0 %v262
    %v384 = vpop.f32.mrf.mxu0
    %v385 = vadd.f32 %v284, %v384
    %v386 = vpop.f32.mrf.mxu0
    %v387 = vpop.f32.mrf.mxu0
    %v388 = vadd.f32 %v284, %v387
    %v389 = vpop.f32.mrf.mxu0
    %390 = vmatprep.mubr.bf16.mxu0 0
    %391 = vmatmul.mubr.bf16.gmra.mxu0 %v263
    %v392 = vpop.f32.mrf.mxu0
    %v393 = vadd.f32 %v284, %v392
    %v394 = vpop.f32.mrf.mxu0
    %v395 = vpop.f32.mrf.mxu0
    %v396 = vadd.f32 %v284, %v395
    %v397 = vpop.f32.mrf.mxu0
    %398 = vdwg.mxu0
    %v399 = vmax.f32 %v369, 0.0
    %v400 = vmax.f32 %v372, 0.0
    %v401 = vmax.f32 %v377, 0.0
    %v402 = vmax.f32 %v380, 0.0
    %v403 = vmax.f32 %v385, 0.0
    %v404 = vmax.f32 %v388, 0.0
    %v405 = vmax.f32 %v393, 0.0
    %v406 = vmax.f32 %v396, 0.0
    %v407 = vld [vmem:[%s6] sm:$0x1]
    %v409 = vlaneseq
    %v410 = vshrl.u32 %v409, 7
    %v411 = vsub.s32 0, %v410
    %v412 = vrot.slane %v407, %v411
    %v414 = vpack.c.bf16 %v399, %v399
    %v415 = vld [vmem:[#allocation8] sm:$0xf]
    %v416 = vld [vmem:[#allocation8 + $0x4] sm:$0xf]
    %v417 = vld [vmem:[#allocation8 + $0x8] sm:$0xf]
    %v418 = vld [vmem:[#allocation8 + $0xc] sm:$0xf]
    %v419 = vld [vmem:[#allocation8 + $0x10] sm:$0xf]
    %v420 = vld [vmem:[#allocation8 + $0x14] sm:$0xf]
    %v421 = vld [vmem:[#allocation8 + $0x18] sm:$0xf]
    %v422 = vld [vmem:[#allocation8 + $0x1c] sm:$0xf]
    %v423 = vld [vmem:[#allocation8 + $0x20] sm:$0xf]
    %v424 = vld [vmem:[#allocation8 + $0x24] sm:$0xf]
    %v425 = vld [vmem:[#allocation8 + $0x28] sm:$0xf]
    %v426 = vld [vmem:[#allocation8 + $0x2c] sm:$0xf]
    %v427 = vld [vmem:[#allocation8 + $0x30] sm:$0xf]
    %v428 = vld [vmem:[#allocation8 + $0x34] sm:$0xf]
    %v429 = vld [vmem:[#allocation8 + $0x38] sm:$0xf]
    %v430 = vld [vmem:[#allocation8 + $0x3c] sm:$0xf]
    %v447 = vunpack.c.l.b16 %v415
    %v448 = vunpack.c.l.b16 %v416
    %v449 = vunpack.c.l.b16 %v417
    %v450 = vunpack.c.l.b16 %v418
    %v451 = vunpack.c.l.b16 %v419
    %v452 = vunpack.c.l.b16 %v420
    %v453 = vunpack.c.l.b16 %v421
    %v454 = vunpack.c.l.b16 %v422
    %v455 = vunpack.c.l.b16 %v423
    %v456 = vunpack.c.l.b16 %v424
    %v457 = vunpack.c.l.b16 %v425
    %v458 = vunpack.c.l.b16 %v426
    %v459 = vunpack.c.l.b16 %v427
    %v460 = vunpack.c.l.b16 %v428
    %v461 = vunpack.c.l.b16 %v429
    %v462 = vunpack.c.l.b16 %v430
    %v463 = vpack.c.b16 %v448, %v447
    %v464 = vpack.c.b16 %v450, %v449
    %v465 = vpack.c.b16 %v452, %v451
    %v466 = vpack.c.b16 %v454, %v453
    %v467 = vpack.c.b16 %v456, %v455
    %v468 = vpack.c.b16 %v458, %v457
    %v469 = vpack.c.b16 %v460, %v459
    %v470 = vpack.c.b16 %v462, %v461
    %479 = vmatprep.subr.bf16.mxu0 0
    %480 = vmatpush1.bf16.msra.mxu0 %v470
    %481 = vmatprep.subr.bf16.mxu0 0
    %482 = vmatpush1.bf16.msra.mxu0 %v469
    %483 = vmatprep.subr.bf16.mxu0 0
    %484 = vmatpush1.bf16.msra.mxu0 %v468
    %485 = vmatprep.subr.bf16.mxu0 0
    %486 = vmatpush1.bf16.msra.mxu0 %v467
    %487 = vmatprep.subr.bf16.mxu0 0
    %488 = vmatpush1.bf16.msra.mxu0 %v466
    %489 = vmatprep.subr.bf16.mxu0 0
    %490 = vmatpush1.bf16.msra.mxu0 %v465
    %491 = vmatprep.subr.bf16.mxu0 0
    %492 = vmatpush1.bf16.msra.mxu0 %v464
    %493 = vmatprep.subr.bf16.mxu0 0
    %494 = vmatpush1.bf16.msra.mxu0 %v463
    %495 = vmatprep.subr.bf16.mxu0 0
    %496 = vmatpush2.bf16.msra.mxu0 0
    %497 = vmatprep.subr.bf16.mxu0 0
    %498 = vmatpush2.bf16.msra.mxu0 0
    %499 = vmatprep.subr.bf16.mxu0 0
    %500 = vmatpush2.bf16.msra.mxu0 0
    %501 = vmatprep.subr.bf16.mxu0 0
    %502 = vmatpush2.bf16.msra.mxu0 0
    %503 = vmatprep.subr.bf16.mxu0 0
    %504 = vmatpush2.bf16.msra.mxu0 0
    %505 = vmatprep.subr.bf16.mxu0 0
    %506 = vmatpush2.bf16.msra.mxu0 0
    %507 = vmatprep.subr.bf16.mxu0 0
    %508 = vmatpush2.bf16.msra.mxu0 0
    %509 = vmatprep.subr.bf16.mxu0 0
    %510 = vmatpush2.bf16.msra.mxu0 0
    %511 = vmatprep.mubr.bf16.mxu0 0
    %512 = vmatmul.mubr.bf16.gmra.mxu0 %v414
    %v513 = vpop.f32.mrf.mxu0
    %v514 = vadd.f32 0.0, %v513
    %v515 = vpop.f32.mrf.mxu0
    %v516 = vpop.f32.mrf.mxu0
    %v517 = vpop.f32.mrf.mxu0
    %518 = vdwg.mxu0
    %v519 = vadd.f32 %v412, %v514
    %v520 = vpack.c.bf16 %v400, %v400
    %v521 = vld [vmem:[#allocation8 + $0x40] sm:$0xf]
    %v522 = vld [vmem:[#allocation8 + $0x44] sm:$0xf]
    %v523 = vld [vmem:[#allocation8 + $0x48] sm:$0xf]
    %v524 = vld [vmem:[#allocation8 + $0x4c] sm:$0xf]
    %v525 = vld [vmem:[#allocation8 + $0x50] sm:$0xf]
    %v526 = vld [vmem:[#allocation8 + $0x54] sm:$0xf]
    %v527 = vld [vmem:[#allocation8 + $0x58] sm:$0xf]
    %v528 = vld [vmem:[#allocation8 + $0x5c] sm:$0xf]
    %v529 = vld [vmem:[#allocation8 + $0x60] sm:$0xf]
    %v530 = vld [vmem:[#allocation8 + $0x64] sm:$0xf]
    %v531 = vld [vmem:[#allocation8 + $0x68] sm:$0xf]
    %v532 = vld [vmem:[#allocation8 + $0x6c] sm:$0xf]
    %v533 = vld [vmem:[#allocation8 + $0x70] sm:$0xf]
    %v534 = vld [vmem:[#allocation8 + $0x74] sm:$0xf]
    %v535 = vld [vmem:[#allocation8 + $0x78] sm:$0xf]
    %v536 = vld [vmem:[#allocation8 + $0x7c] sm:$0xf]
    %v553 = vunpack.c.l.b16 %v521
    %v554 = vunpack.c.l.b16 %v522
    %v555 = vunpack.c.l.b16 %v523
    %v556 = vunpack.c.l.b16 %v524
    %v557 = vunpack.c.l.b16 %v525
    %v558 = vunpack.c.l.b16 %v526
    %v559 = vunpack.c.l.b16 %v527
    %v560 = vunpack.c.l.b16 %v528
    %v561 = vunpack.c.l.b16 %v529
    %v562 = vunpack.c.l.b16 %v530
    %v563 = vunpack.c.l.b16 %v531
    %v564 = vunpack.c.l.b16 %v532
    %v565 = vunpack.c.l.b16 %v533
    %v566 = vunpack.c.l.b16 %v534
    %v567 = vunpack.c.l.b16 %v535
    %v568 = vunpack.c.l.b16 %v536
    %v569 = vpack.c.b16 %v554, %v553
    %v570 = vpack.c.b16 %v556, %v555
    %v571 = vpack.c.b16 %v558, %v557
    %v572 = vpack.c.b16 %v560, %v559
    %v573 = vpack.c.b16 %v562, %v561
    %v574 = vpack.c.b16 %v564, %v563
    %v575 = vpack.c.b16 %v566, %v565
    %v576 = vpack.c.b16 %v568, %v567
    %585 = vmatprep.subr.bf16.mxu0 0
    %586 = vmatpush1.bf16.msra.mxu0 %v576
    %587 = vmatprep.subr.bf16.mxu0 0
    %588 = vmatpush1.bf16.msra.mxu0 %v575
    %589 = vmatprep.subr.bf16.mxu0 0
    %590 = vmatpush1.bf16.msra.mxu0 %v574
    %591 = vmatprep.subr.bf16.mxu0 0
    %592 = vmatpush1.bf16.msra.mxu0 %v573
    %593 = vmatprep.subr.bf16.mxu0 0
    %594 = vmatpush1.bf16.msra.mxu0 %v572
    %595 = vmatprep.subr.bf16.mxu0 0
    %596 = vmatpush1.bf16.msra.mxu0 %v571
    %597 = vmatprep.subr.bf16.mxu0 0
    %598 = vmatpush1.bf16.msra.mxu0 %v570
    %599 = vmatprep.subr.bf16.mxu0 0
    %600 = vmatpush1.bf16.msra.mxu0 %v569
    %601 = vmatprep.subr.bf16.mxu0 0
    %602 = vmatpush2.bf16.msra.mxu0 0
    %603 = vmatprep.subr.bf16.mxu0 0
    %604 = vmatpush2.bf16.msra.mxu0 0
    %605 = vmatprep.subr.bf16.mxu0 0
    %606 = vmatpush2.bf16.msra.mxu0 0
    %607 = vmatprep.subr.bf16.mxu0 0
    %608 = vmatpush2.bf16.msra.mxu0 0
    %609 = vmatprep.subr.bf16.mxu0 0
    %610 = vmatpush2.bf16.msra.mxu0 0
    %611 = vmatprep.subr.bf16.mxu0 0
    %612 = vmatpush2.bf16.msra.mxu0 0
    %613 = vmatprep.subr.bf16.mxu0 0
    %614 = vmatpush2.bf16.msra.mxu0 0
    %615 = vmatprep.subr.bf16.mxu0 0
    %616 = vmatpush2.bf16.msra.mxu0 0
    %617 = vmatprep.mubr.bf16.mxu0 0
    %618 = vmatmul.mubr.bf16.gmra.mxu0 %v520
    %v619 = vpop.f32.mrf.mxu0
    %v620 = vadd.f32 0.0, %v619
    %v621 = vpop.f32.mrf.mxu0
    %v622 = vpop.f32.mrf.mxu0
    %v623 = vpop.f32.mrf.mxu0
    %624 = vdwg.mxu0
    %v625 = vadd.f32 %v519, %v620
    %v626 = vpack.c.bf16 %v401, %v401
    %v627 = vld [vmem:[#allocation8 + $0x80] sm:$0xf]
    %v628 = vld [vmem:[#allocation8 + $0x84] sm:$0xf]
    %v629 = vld [vmem:[#allocation8 + $0x88] sm:$0xf]
    %v630 = vld [vmem:[#allocation8 + $0x8c] sm:$0xf]
    %v631 = vld [vmem:[#allocation8 + $0x90] sm:$0xf]
    %v632 = vld [vmem:[#allocation8 + $0x94] sm:$0xf]
    %v633 = vld [vmem:[#allocation8 + $0x98] sm:$0xf]
    %v634 = vld [vmem:[#allocation8 + $0x9c] sm:$0xf]
    %v635 = vld [vmem:[#allocation8 + $0xa0] sm:$0xf]
    %v636 = vld [vmem:[#allocation8 + $0xa4] sm:$0xf]
    %v637 = vld [vmem:[#allocation8 + $0xa8] sm:$0xf]
    %v638 = vld [vmem:[#allocation8 + $0xac] sm:$0xf]
    %v639 = vld [vmem:[#allocation8 + $0xb0] sm:$0xf]
    %v640 = vld [vmem:[#allocation8 + $0xb4] sm:$0xf]
    %v641 = vld [vmem:[#allocation8 + $0xb8] sm:$0xf]
    %v642 = vld [vmem:[#allocation8 + $0xbc] sm:$0xf]
    %v659 = vunpack.c.l.b16 %v627
    %v660 = vunpack.c.l.b16 %v628
    %v661 = vunpack.c.l.b16 %v629
    %v662 = vunpack.c.l.b16 %v630
    %v663 = vunpack.c.l.b16 %v631
    %v664 = vunpack.c.l.b16 %v632
    %v665 = vunpack.c.l.b16 %v633
    %v666 = vunpack.c.l.b16 %v634
    %v667 = vunpack.c.l.b16 %v635
    %v668 = vunpack.c.l.b16 %v636
    %v669 = vunpack.c.l.b16 %v637
    %v670 = vunpack.c.l.b16 %v638
    %v671 = vunpack.c.l.b16 %v639
    %v672 = vunpack.c.l.b16 %v640
    %v673 = vunpack.c.l.b16 %v641
    %v674 = vunpack.c.l.b16 %v642
    %v675 = vpack.c.b16 %v660, %v659
    %v676 = vpack.c.b16 %v662, %v661
    %v677 = vpack.c.b16 %v664, %v663
    %v678 = vpack.c.b16 %v666, %v665
    %v679 = vpack.c.b16 %v668, %v667
    %v680 = vpack.c.b16 %v670, %v669
    %v681 = vpack.c.b16 %v672, %v671
    %v682 = vpack.c.b16 %v674, %v673
    %691 = vmatprep.subr.bf16.mxu0 0
    %692 = vmatpush1.bf16.msra.mxu0 %v682
    %693 = vmatprep.subr.bf16.mxu0 0
    %694 = vmatpush1.bf16.msra.mxu0 %v681
    %695 = vmatprep.subr.bf16.mxu0 0
    %696 = vmatpush1.bf16.msra.mxu0 %v680
    %697 = vmatprep.subr.bf16.mxu0 0
    %698 = vmatpush1.bf16.msra.mxu0 %v679
    %699 = vmatprep.subr.bf16.mxu0 0
    %700 = vmatpush1.bf16.msra.mxu0 %v678
    %701 = vmatprep.subr.bf16.mxu0 0
    %702 = vmatpush1.bf16.msra.mxu0 %v677
    %703 = vmatprep.subr.bf16.mxu0 0
    %704 = vmatpush1.bf16.msra.mxu0 %v676
    %705 = vmatprep.subr.bf16.mxu0 0
    %706 = vmatpush1.bf16.msra.mxu0 %v675
    %707 = vmatprep.subr.bf16.mxu0 0
    %708 = vmatpush2.bf16.msra.mxu0 0
    %709 = vmatprep.subr.bf16.mxu0 0
    %710 = vmatpush2.bf16.msra.mxu0 0
    %711 = vmatprep.subr.bf16.mxu0 0
    %712 = vmatpush2.bf16.msra.mxu0 0
    %713 = vmatprep.subr.bf16.mxu0 0
    %714 = vmatpush2.bf16.msra.mxu0 0
    %715 = vmatprep.subr.bf16.mxu0 0
    %716 = vmatpush2.bf16.msra.mxu0 0
    %717 = vmatprep.subr.bf16.mxu0 0
    %718 = vmatpush2.bf16.msra.mxu0 0
    %719 = vmatprep.subr.bf16.mxu0 0
    %720 = vmatpush2.bf16.msra.mxu0 0
    %721 = vmatprep.subr.bf16.mxu0 0
    %722 = vmatpush2.bf16.msra.mxu0 0
    %723 = vmatprep.mubr.bf16.mxu0 0
    %724 = vmatmul.mubr.bf16.gmra.mxu0 %v626
    %v725 = vpop.f32.mrf.mxu0
    %v726 = vadd.f32 0.0, %v725
    %v727 = vpop.f32.mrf.mxu0
    %v728 = vpop.f32.mrf.mxu0
    %v729 = vpop.f32.mrf.mxu0
    %730 = vdwg.mxu0
    %v731 = vadd.f32 %v625, %v726
    %v732 = vpack.c.bf16 %v402, %v402
    %v733 = vld [vmem:[#allocation8 + $0xc0] sm:$0xf]
    %v734 = vld [vmem:[#allocation8 + $0xc4] sm:$0xf]
    %v735 = vld [vmem:[#allocation8 + $0xc8] sm:$0xf]
    %v736 = vld [vmem:[#allocation8 + $0xcc] sm:$0xf]
    %v737 = vld [vmem:[#allocation8 + $0xd0] sm:$0xf]
    %v738 = vld [vmem:[#allocation8 + $0xd4] sm:$0xf]
    %v739 = vld [vmem:[#allocation8 + $0xd8] sm:$0xf]
    %v740 = vld [vmem:[#allocation8 + $0xdc] sm:$0xf]
    %v741 = vld [vmem:[#allocation8 + $0xe0] sm:$0xf]
    %v742 = vld [vmem:[#allocation8 + $0xe4] sm:$0xf]
    %v743 = vld [vmem:[#allocation8 + $0xe8] sm:$0xf]
    %v744 = vld [vmem:[#allocation8 + $0xec] sm:$0xf]
    %v745 = vld [vmem:[#allocation8 + $0xf0] sm:$0xf]
    %v746 = vld [vmem:[#allocation8 + $0xf4] sm:$0xf]
    %v747 = vld [vmem:[#allocation8 + $0xf8] sm:$0xf]
    %v748 = vld [vmem:[#allocation8 + $0xfc] sm:$0xf]
    %v765 = vunpack.c.l.b16 %v733
    %v766 = vunpack.c.l.b16 %v734
    %v767 = vunpack.c.l.b16 %v735
    %v768 = vunpack.c.l.b16 %v736
    %v769 = vunpack.c.l.b16 %v737
    %v770 = vunpack.c.l.b16 %v738
    %v771 = vunpack.c.l.b16 %v739
    %v772 = vunpack.c.l.b16 %v740
    %v773 = vunpack.c.l.b16 %v741
    %v774 = vunpack.c.l.b16 %v742
    %v775 = vunpack.c.l.b16 %v743
    %v776 = vunpack.c.l.b16 %v744
    %v777 = vunpack.c.l.b16 %v745
    %v778 = vunpack.c.l.b16 %v746
    %v779 = vunpack.c.l.b16 %v747
    %v780 = vunpack.c.l.b16 %v748
    %v781 = vpack.c.b16 %v766, %v765
    %v782 = vpack.c.b16 %v768, %v767
    %v783 = vpack.c.b16 %v770, %v769
    %v784 = vpack.c.b16 %v772, %v771
    %v785 = vpack.c.b16 %v774, %v773
    %v786 = vpack.c.b16 %v776, %v775
    %v787 = vpack.c.b16 %v778, %v777
    %v788 = vpack.c.b16 %v780, %v779
    %797 = vmatprep.subr.bf16.mxu0 0
    %798 = vmatpush1.bf16.msra.mxu0 %v788
    %799 = vmatprep.subr.bf16.mxu0 0
    %800 = vmatpush1.bf16.msra.mxu0 %v787
    %801 = vmatprep.subr.bf16.mxu0 0
    %802 = vmatpush1.bf16.msra.mxu0 %v786
    %803 = vmatprep.subr.bf16.mxu0 0
    %804 = vmatpush1.bf16.msra.mxu0 %v785
    %805 = vmatprep.subr.bf16.mxu0 0
    %806 = vmatpush1.bf16.msra.mxu0 %v784
    %807 = vmatprep.subr.bf16.mxu0 0
    %808 = vmatpush1.bf16.msra.mxu0 %v783
    %809 = vmatprep.subr.bf16.mxu0 0
    %810 = vmatpush1.bf16.msra.mxu0 %v782
    %811 = vmatprep.subr.bf16.mxu0 0
    %812 = vmatpush1.bf16.msra.mxu0 %v781
    %813 = vmatprep.subr.bf16.mxu0 0
    %814 = vmatpush2.bf16.msra.mxu0 0
    %815 = vmatprep.subr.bf16.mxu0 0
    %816 = vmatpush2.bf16.msra.mxu0 0
    %817 = vmatprep.subr.bf16.mxu0 0
    %818 = vmatpush2.bf16.msra.mxu0 0
    %819 = vmatprep.subr.bf16.mxu0 0
    %820 = vmatpush2.bf16.msra.mxu0 0
    %821 = vmatprep.subr.bf16.mxu0 0
    %822 = vmatpush2.bf16.msra.mxu0 0
    %823 = vmatprep.subr.bf16.mxu0 0
    %824 = vmatpush2.bf16.msra.mxu0 0
    %825 = vmatprep.subr.bf16.mxu0 0
    %826 = vmatpush2.bf16.msra.mxu0 0
    %827 = vmatprep.subr.bf16.mxu0 0
    %828 = vmatpush2.bf16.msra.mxu0 0
    %829 = vmatprep.mubr.bf16.mxu0 0
    %830 = vmatmul.mubr.bf16.gmra.mxu0 %v732
    %v831 = vpop.f32.mrf.mxu0
    %v832 = vadd.f32 0.0, %v831
    %v833 = vpop.f32.mrf.mxu0
    %v834 = vpop.f32.mrf.mxu0
    %v835 = vpop.f32.mrf.mxu0
    %836 = vdwg.mxu0
    %v837 = vadd.f32 %v731, %v832
    %v838 = vpack.c.bf16 %v403, %v403
    %v839 = vld [vmem:[#allocation8 + $0x100] sm:$0xf]
    %v840 = vld [vmem:[#allocation8 + $0x104] sm:$0xf]
    %v841 = vld [vmem:[#allocation8 + $0x108] sm:$0xf]
    %v842 = vld [vmem:[#allocation8 + $0x10c] sm:$0xf]
    %v843 = vld [vmem:[#allocation8 + $0x110] sm:$0xf]
    %v844 = vld [vmem:[#allocation8 + $0x114] sm:$0xf]
    %v845 = vld [vmem:[#allocation8 + $0x118] sm:$0xf]
    %v846 = vld [vmem:[#allocation8 + $0x11c] sm:$0xf]
    %v847 = vld [vmem:[#allocation8 + $0x120] sm:$0xf]
    %v848 = vld [vmem:[#allocation8 + $0x124] sm:$0xf]
    %v849 = vld [vmem:[#allocation8 + $0x128] sm:$0xf]
    %v850 = vld [vmem:[#allocation8 + $0x12c] sm:$0xf]
    %v851 = vld [vmem:[#allocation8 + $0x130] sm:$0xf]
    %v852 = vld [vmem:[#allocation8 + $0x134] sm:$0xf]
    %v853 = vld [vmem:[#allocation8 + $0x138] sm:$0xf]
    %v854 = vld [vmem:[#allocation8 + $0x13c] sm:$0xf]
    %v871 = vunpack.c.l.b16 %v839
    %v872 = vunpack.c.l.b16 %v840
    %v873 = vunpack.c.l.b16 %v841
    %v874 = vunpack.c.l.b16 %v842
    %v875 = vunpack.c.l.b16 %v843
    %v876 = vunpack.c.l.b16 %v844
    %v877 = vunpack.c.l.b16 %v845
    %v878 = vunpack.c.l.b16 %v846
    %v879 = vunpack.c.l.b16 %v847
    %v880 = vunpack.c.l.b16 %v848
    %v881 = vunpack.c.l.b16 %v849
    %v882 = vunpack.c.l.b16 %v850
    %v883 = vunpack.c.l.b16 %v851
    %v884 = vunpack.c.l.b16 %v852
    %v885 = vunpack.c.l.b16 %v853
    %v886 = vunpack.c.l.b16 %v854
    %v887 = vpack.c.b16 %v872, %v871
    %v888 = vpack.c.b16 %v874, %v873
    %v889 = vpack.c.b16 %v876, %v875
    %v890 = vpack.c.b16 %v878, %v877
    %v891 = vpack.c.b16 %v880, %v879
    %v892 = vpack.c.b16 %v882, %v881
    %v893 = vpack.c.b16 %v884, %v883
    %v894 = vpack.c.b16 %v886, %v885
    %903 = vmatprep.subr.bf16.mxu0 0
    %904 = vmatpush1.bf16.msra.mxu0 %v894
    %905 = vmatprep.subr.bf16.mxu0 0
    %906 = vmatpush1.bf16.msra.mxu0 %v893
    %907 = vmatprep.subr.bf16.mxu0 0
    %908 = vmatpush1.bf16.msra.mxu0 %v892
    %909 = vmatprep.subr.bf16.mxu0 0
    %910 = vmatpush1.bf16.msra.mxu0 %v891
    %911 = vmatprep.subr.bf16.mxu0 0
    %912 = vmatpush1.bf16.msra.mxu0 %v890
    %913 = vmatprep.subr.bf16.mxu0 0
    %914 = vmatpush1.bf16.msra.mxu0 %v889
    %915 = vmatprep.subr.bf16.mxu0 0
    %916 = vmatpush1.bf16.msra.mxu0 %v888
    %917 = vmatprep.subr.bf16.mxu0 0
    %918 = vmatpush1.bf16.msra.mxu0 %v887
    %919 = vmatprep.subr.bf16.mxu0 0
    %920 = vmatpush2.bf16.msra.mxu0 0
    %921 = vmatprep.subr.bf16.mxu0 0
    %922 = vmatpush2.bf16.msra.mxu0 0
    %923 = vmatprep.subr.bf16.mxu0 0
    %924 = vmatpush2.bf16.msra.mxu0 0
    %925 = vmatprep.subr.bf16.mxu0 0
    %926 = vmatpush2.bf16.msra.mxu0 0
    %927 = vmatprep.subr.bf16.mxu0 0
    %928 = vmatpush2.bf16.msra.mxu0 0
    %929 = vmatprep.subr.bf16.mxu0 0
    %930 = vmatpush2.bf16.msra.mxu0 0
    %931 = vmatprep.subr.bf16.mxu0 0
    %932 = vmatpush2.bf16.msra.mxu0 0
    %933 = vmatprep.subr.bf16.mxu0 0
    %934 = vmatpush2.bf16.msra.mxu0 0
    %935 = vmatprep.mubr.bf16.mxu0 0
    %936 = vmatmul.mubr.bf16.gmra.mxu0 %v838
    %v937 = vpop.f32.mrf.mxu0
    %v938 = vadd.f32 0.0, %v937
    %v939 = vpop.f32.mrf.mxu0
    %v940 = vpop.f32.mrf.mxu0
    %v941 = vpop.f32.mrf.mxu0
    %942 = vdwg.mxu0
    %v943 = vadd.f32 %v837, %v938
    %v944 = vpack.c.bf16 %v404, %v404
    %v945 = vld [vmem:[#allocation8 + $0x140] sm:$0xf]
    %v946 = vld [vmem:[#allocation8 + $0x144] sm:$0xf]
    %v947 = vld [vmem:[#allocation8 + $0x148] sm:$0xf]
    %v948 = vld [vmem:[#allocation8 + $0x14c] sm:$0xf]
    %v949 = vld [vmem:[#allocation8 + $0x150] sm:$0xf]
    %v950 = vld [vmem:[#allocation8 + $0x154] sm:$0xf]
    %v951 = vld [vmem:[#allocation8 + $0x158] sm:$0xf]
    %v952 = vld [vmem:[#allocation8 + $0x15c] sm:$0xf]
    %v953 = vld [vmem:[#allocation8 + $0x160] sm:$0xf]
    %v954 = vld [vmem:[#allocation8 + $0x164] sm:$0xf]
    %v955 = vld [vmem:[#allocation8 + $0x168] sm:$0xf]
    %v956 = vld [vmem:[#allocation8 + $0x16c] sm:$0xf]
    %v957 = vld [vmem:[#allocation8 + $0x170] sm:$0xf]
    %v958 = vld [vmem:[#allocation8 + $0x174] sm:$0xf]
    %v959 = vld [vmem:[#allocation8 + $0x178] sm:$0xf]
    %v960 = vld [vmem:[#allocation8 + $0x17c] sm:$0xf]
    %v977 = vunpack.c.l.b16 %v945
    %v978 = vunpack.c.l.b16 %v946
    %v979 = vunpack.c.l.b16 %v947
    %v980 = vunpack.c.l.b16 %v948
    %v981 = vunpack.c.l.b16 %v949
    %v982 = vunpack.c.l.b16 %v950
    %v983 = vunpack.c.l.b16 %v951
    %v984 = vunpack.c.l.b16 %v952
    %v985 = vunpack.c.l.b16 %v953
    %v986 = vunpack.c.l.b16 %v954
    %v987 = vunpack.c.l.b16 %v955
    %v988 = vunpack.c.l.b16 %v956
    %v989 = vunpack.c.l.b16 %v957
    %v990 = vunpack.c.l.b16 %v958
    %v991 = vunpack.c.l.b16 %v959
    %v992 = vunpack.c.l.b16 %v960
    %v993 = vpack.c.b16 %v978, %v977
    %v994 = vpack.c.b16 %v980, %v979
    %v995 = vpack.c.b16 %v982, %v981
    %v996 = vpack.c.b16 %v984, %v983
    %v997 = vpack.c.b16 %v986, %v985
    %v998 = vpack.c.b16 %v988, %v987
    %v999 = vpack.c.b16 %v990, %v989
    %v1000 = vpack.c.b16 %v992, %v991
    %1009 = vmatprep.subr.bf16.mxu0 0
    %1010 = vmatpush1.bf16.msra.mxu0 %v1000
    %1011 = vmatprep.subr.bf16.mxu0 0
    %1012 = vmatpush1.bf16.msra.mxu0 %v999
    %1013 = vmatprep.subr.bf16.mxu0 0
    %1014 = vmatpush1.bf16.msra.mxu0 %v998
    %1015 = vmatprep.subr.bf16.mxu0 0
    %1016 = vmatpush1.bf16.msra.mxu0 %v997
    %1017 = vmatprep.subr.bf16.mxu0 0
    %1018 = vmatpush1.bf16.msra.mxu0 %v996
    %1019 = vmatprep.subr.bf16.mxu0 0
    %1020 = vmatpush1.bf16.msra.mxu0 %v995
    %1021 = vmatprep.subr.bf16.mxu0 0
    %1022 = vmatpush1.bf16.msra.mxu0 %v994
    %1023 = vmatprep.subr.bf16.mxu0 0
    %1024 = vmatpush1.bf16.msra.mxu0 %v993
    %1025 = vmatprep.subr.bf16.mxu0 0
    %1026 = vmatpush2.bf16.msra.mxu0 0
    %1027 = vmatprep.subr.bf16.mxu0 0
    %1028 = vmatpush2.bf16.msra.mxu0 0
    %1029 = vmatprep.subr.bf16.mxu0 0
    %1030 = vmatpush2.bf16.msra.mxu0 0
    %1031 = vmatprep.subr.bf16.mxu0 0
    %1032 = vmatpush2.bf16.msra.mxu0 0
    %1033 = vmatprep.subr.bf16.mxu0 0
    %1034 = vmatpush2.bf16.msra.mxu0 0
    %1035 = vmatprep.subr.bf16.mxu0 0
    %1036 = vmatpush2.bf16.msra.mxu0 0
    %1037 = vmatprep.subr.bf16.mxu0 0
    %1038 = vmatpush2.bf16.msra.mxu0 0
    %1039 = vmatprep.subr.bf16.mxu0 0
    %1040 = vmatpush2.bf16.msra.mxu0 0
    %1041 = vmatprep.mubr.bf16.mxu0 0
    %1042 = vmatmul.mubr.bf16.gmra.mxu0 %v944
    %v1043 = vpop.f32.mrf.mxu0
    %v1044 = vadd.f32 0.0, %v1043
    %v1045 = vpop.f32.mrf.mxu0
    %v1046 = vpop.f32.mrf.mxu0
    %v1047 = vpop.f32.mrf.mxu0
    %1048 = vdwg.mxu0
    %v1049 = vadd.f32 %v943, %v1044
    %v1050 = vpack.c.bf16 %v405, %v405
    %v1051 = vld [vmem:[#allocation8 + $0x180] sm:$0xf]
    %v1052 = vld [vmem:[#allocation8 + $0x184] sm:$0xf]
    %v1053 = vld [vmem:[#allocation8 + $0x188] sm:$0xf]
    %v1054 = vld [vmem:[#allocation8 + $0x18c] sm:$0xf]
    %v1055 = vld [vmem:[#allocation8 + $0x190] sm:$0xf]
    %v1056 = vld [vmem:[#allocation8 + $0x194] sm:$0xf]
    %v1057 = vld [vmem:[#allocation8 + $0x198] sm:$0xf]
    %v1058 = vld [vmem:[#allocation8 + $0x19c] sm:$0xf]
    %v1059 = vld [vmem:[#allocation8 + $0x1a0] sm:$0xf]
    %v1060 = vld [vmem:[#allocation8 + $0x1a4] sm:$0xf]
    %v1061 = vld [vmem:[#allocation8 + $0x1a8] sm:$0xf]
    %v1062 = vld [vmem:[#allocation8 + $0x1ac] sm:$0xf]
    %v1063 = vld [vmem:[#allocation8 + $0x1b0] sm:$0xf]
    %v1064 = vld [vmem:[#allocation8 + $0x1b4] sm:$0xf]
    %v1065 = vld [vmem:[#allocation8 + $0x1b8] sm:$0xf]
    %v1066 = vld [vmem:[#allocation8 + $0x1bc] sm:$0xf]
    %v1083 = vunpack.c.l.b16 %v1051
    %v1084 = vunpack.c.l.b16 %v1052
    %v1085 = vunpack.c.l.b16 %v1053
    %v1086 = vunpack.c.l.b16 %v1054
    %v1087 = vunpack.c.l.b16 %v1055
    %v1088 = vunpack.c.l.b16 %v1056
    %v1089 = vunpack.c.l.b16 %v1057
    %v1090 = vunpack.c.l.b16 %v1058
    %v1091 = vunpack.c.l.b16 %v1059
    %v1092 = vunpack.c.l.b16 %v1060
    %v1093 = vunpack.c.l.b16 %v1061
    %v1094 = vunpack.c.l.b16 %v1062
    %v1095 = vunpack.c.l.b16 %v1063
    %v1096 = vunpack.c.l.b16 %v1064
    %v1097 = vunpack.c.l.b16 %v1065
    %v1098 = vunpack.c.l.b16 %v1066
    %v1099 = vpack.c.b16 %v1084, %v1083
    %v1100 = vpack.c.b16 %v1086, %v1085
    %v1101 = vpack.c.b16 %v1088, %v1087
    %v1102 = vpack.c.b16 %v1090, %v1089
    %v1103 = vpack.c.b16 %v1092, %v1091
    %v1104 = vpack.c.b16 %v1094, %v1093
    %v1105 = vpack.c.b16 %v1096, %v1095
    %v1106 = vpack.c.b16 %v1098, %v1097
    %1115 = vmatprep.subr.bf16.mxu0 0
    %1116 = vmatpush1.bf16.msra.mxu0 %v1106
    %1117 = vmatprep.subr.bf16.mxu0 0
    %1118 = vmatpush1.bf16.msra.mxu0 %v1105
    %1119 = vmatprep.subr.bf16.mxu0 0
    %1120 = vmatpush1.bf16.msra.mxu0 %v1104
    %1121 = vmatprep.subr.bf16.mxu0 0
    %1122 = vmatpush1.bf16.msra.mxu0 %v1103
    %1123 = vmatprep.subr.bf16.mxu0 0
    %1124 = vmatpush1.bf16.msra.mxu0 %v1102
    %1125 = vmatprep.subr.bf16.mxu0 0
    %1126 = vmatpush1.bf16.msra.mxu0 %v1101
    %1127 = vmatprep.subr.bf16.mxu0 0
    %1128 = vmatpush1.bf16.msra.mxu0 %v1100
    %1129 = vmatprep.subr.bf16.mxu0 0
    %1130 = vmatpush1.bf16.msra.mxu0 %v1099
    %1131 = vmatprep.subr.bf16.mxu0 0
    %1132 = vmatpush2.bf16.msra.mxu0 0
    %1133 = vmatprep.subr.bf16.mxu0 0
    %1134 = vmatpush2.bf16.msra.mxu0 0
    %1135 = vmatprep.subr.bf16.mxu0 0
    %1136 = vmatpush2.bf16.msra.mxu0 0
    %1137 = vmatprep.subr.bf16.mxu0 0
    %1138 = vmatpush2.bf16.msra.mxu0 0
    %1139 = vmatprep.subr.bf16.mxu0 0
    %1140 = vmatpush2.bf16.msra.mxu0 0
    %1141 = vmatprep.subr.bf16.mxu0 0
    %1142 = vmatpush2.bf16.msra.mxu0 0
    %1143 = vmatprep.subr.bf16.mxu0 0
    %1144 = vmatpush2.bf16.msra.mxu0 0
    %1145 = vmatprep.subr.bf16.mxu0 0
    %1146 = vmatpush2.bf16.msra.mxu0 0
    %1147 = vmatprep.mubr.bf16.mxu0 0
    %1148 = vmatmul.mubr.bf16.gmra.mxu0 %v1050
    %v1149 = vpop.f32.mrf.mxu0
    %v1150 = vadd.f32 0.0, %v1149
    %v1151 = vpop.f32.mrf.mxu0
    %v1152 = vpop.f32.mrf.mxu0
    %v1153 = vpop.f32.mrf.mxu0
    %1154 = vdwg.mxu0
    %v1155 = vadd.f32 %v1049, %v1150
    %v1156 = vpack.c.bf16 %v406, %v406
    %v1157 = vld [vmem:[#allocation8 + $0x1c0] sm:$0xf]
    %v1158 = vld [vmem:[#allocation8 + $0x1c4] sm:$0xf]
    %v1159 = vld [vmem:[#allocation8 + $0x1c8] sm:$0xf]
    %v1160 = vld [vmem:[#allocation8 + $0x1cc] sm:$0xf]
    %v1161 = vld [vmem:[#allocation8 + $0x1d0] sm:$0xf]
    %v1162 = vld [vmem:[#allocation8 + $0x1d4] sm:$0xf]
    %v1163 = vld [vmem:[#allocation8 + $0x1d8] sm:$0xf]
    %v1164 = vld [vmem:[#allocation8 + $0x1dc] sm:$0xf]
    %v1165 = vld [vmem:[#allocation8 + $0x1e0] sm:$0xf]
    %v1166 = vld [vmem:[#allocation8 + $0x1e4] sm:$0xf]
    %v1167 = vld [vmem:[#allocation8 + $0x1e8] sm:$0xf]
    %v1168 = vld [vmem:[#allocation8 + $0x1ec] sm:$0xf]
    %v1169 = vld [vmem:[#allocation8 + $0x1f0] sm:$0xf]
    %v1170 = vld [vmem:[#allocation8 + $0x1f4] sm:$0xf]
    %v1171 = vld [vmem:[#allocation8 + $0x1f8] sm:$0xf]
    %v1172 = vld [vmem:[#allocation8 + $0x1fc] sm:$0xf]
    %v1189 = vunpack.c.l.b16 %v1157
    %v1190 = vunpack.c.l.b16 %v1158
    %v1191 = vunpack.c.l.b16 %v1159
    %v1192 = vunpack.c.l.b16 %v1160
    %v1193 = vunpack.c.l.b16 %v1161
    %v1194 = vunpack.c.l.b16 %v1162
    %v1195 = vunpack.c.l.b16 %v1163
    %v1196 = vunpack.c.l.b16 %v1164
    %v1197 = vunpack.c.l.b16 %v1165
    %v1198 = vunpack.c.l.b16 %v1166
    %v1199 = vunpack.c.l.b16 %v1167
    %v1200 = vunpack.c.l.b16 %v1168
    %v1201 = vunpack.c.l.b16 %v1169
    %v1202 = vunpack.c.l.b16 %v1170
    %v1203 = vunpack.c.l.b16 %v1171
    %v1204 = vunpack.c.l.b16 %v1172
    %v1205 = vpack.c.b16 %v1190, %v1189
    %v1206 = vpack.c.b16 %v1192, %v1191
    %v1207 = vpack.c.b16 %v1194, %v1193
    %v1208 = vpack.c.b16 %v1196, %v1195
    %v1209 = vpack.c.b16 %v1198, %v1197
    %v1210 = vpack.c.b16 %v1200, %v1199
    %v1211 = vpack.c.b16 %v1202, %v1201
    %v1212 = vpack.c.b16 %v1204, %v1203
    %1221 = vmatprep.subr.bf16.mxu0 0
    %1222 = vmatpush1.bf16.msra.mxu0 %v1212
    %1223 = vmatprep.subr.bf16.mxu0 0
    %1224 = vmatpush1.bf16.msra.mxu0 %v1211
    %1225 = vmatprep.subr.bf16.mxu0 0
    %1226 = vmatpush1.bf16.msra.mxu0 %v1210
    %1227 = vmatprep.subr.bf16.mxu0 0
    %1228 = vmatpush1.bf16.msra.mxu0 %v1209
    %1229 = vmatprep.subr.bf16.mxu0 0
    %1230 = vmatpush1.bf16.msra.mxu0 %v1208
    %1231 = vmatprep.subr.bf16.mxu0 0
    %1232 = vmatpush1.bf16.msra.mxu0 %v1207
    %1233 = vmatprep.subr.bf16.mxu0 0
    %1234 = vmatpush1.bf16.msra.mxu0 %v1206
    %1235 = vmatprep.subr.bf16.mxu0 0
    %1236 = vmatpush1.bf16.msra.mxu0 %v1205
    %1237 = vmatprep.subr.bf16.mxu0 0
    %1238 = vmatpush2.bf16.msra.mxu0 0
    %1239 = vmatprep.subr.bf16.mxu0 0
    %1240 = vmatpush2.bf16.msra.mxu0 0
    %1241 = vmatprep.subr.bf16.mxu0 0
    %1242 = vmatpush2.bf16.msra.mxu0 0
    %1243 = vmatprep.subr.bf16.mxu0 0
    %1244 = vmatpush2.bf16.msra.mxu0 0
    %1245 = vmatprep.subr.bf16.mxu0 0
    %1246 = vmatpush2.bf16.msra.mxu0 0
    %1247 = vmatprep.subr.bf16.mxu0 0
    %1248 = vmatpush2.bf16.msra.mxu0 0
    %1249 = vmatprep.subr.bf16.mxu0 0
    %1250 = vmatpush2.bf16.msra.mxu0 0
    %1251 = vmatprep.subr.bf16.mxu0 0
    %1252 = vmatpush2.bf16.msra.mxu0 0
    %1253 = vmatprep.mubr.bf16.mxu0 0
    %1254 = vmatmul.mubr.bf16.gmra.mxu0 %v1156
    %v1255 = vpop.f32.mrf.mxu0
    %v1256 = vadd.f32 0.0, %v1255
    %v1257 = vpop.f32.mrf.mxu0
    %v1258 = vpop.f32.mrf.mxu0
    %v1259 = vpop.f32.mrf.mxu0
    %1260 = vdwg.mxu0
    %v1261 = vadd.f32 %v1155, %v1256
    %1262 = vst [vmem:[#allocation10] sm:$0xff] %v1261
    // Predicated region
    $region46: #{tpu_custom_call.1} parent=1 // pred_check
      _
    $region47: #{tpu_custom_call.1} parent=1 // pred_check_branch
      %1264 = sbr.rel (0) target = $region49
    $region48: #{tpu_custom_call.1} parent=1 // pred_region
      %s1266 = ssub.s32 128, 128
      %1267 = vsyncadd [#allocation4], %s1266
      %s1269 = sshll.u32 [#allocation10], 4
      %s1270 = int_to_ptr.vmem [resolvable:$true] %s1269
      %1272 = dma.vmem_to_hbm [thread:$0]  %s1270, 128, %s7, [#allocation4]
    $region49: #{tpu_custom_call.1} parent=1 // pred_fallthru
      _
    // Predicated region
    $region50: #{tpu_custom_call.1} parent=1 // pred_check
      _
    $region51: #{tpu_custom_call.1} parent=1 // pred_check_branch
      %1274 = sbr.rel (0) target = $region53
    $region52: #{tpu_custom_call.1} parent=1 // pred_region
      %1275 = dma.done [#allocation4], 128
    $region53: #{tpu_custom_call.1} parent=1 // pred_fallthru
      _
    %1276 = vsyncpa [#allocation3], 1
    %1277 = vsyncpa [#allocation6], 1
    %1278 = vsyncpa [#allocation9], 1
    %1279 = vsyncpa [#allocation4], 1

</llo_original>
